<compile_context>
chip_gen: v5e
topology: v5e:2x2
jax: 0.10.0
libtpu: 0.0.40
codegen_flags: <defaults>
</compile_context>

<pallas_src>
import jax
import jax.numpy as jnp
from jax.experimental import pallas as pl
from jax.experimental.pallas import tpu as pltpu

_SUBLANE = 8
_LANE = 128


def _round_up(n, m):
    return ((n + m - 1) // m) * m


def qnet_kernel(x_ref, w1_ref, b1_ref, w2_ref, b2_ref, o_ref):
    # fc1 on the MXU: (hidden, k_pad) @ (k_pad, tb) -> (hidden, tb), f32 accumulation.
    h = jnp.dot(w1_ref[...], x_ref[...], preferred_element_type=jnp.float32)
    h = jnp.maximum(h + b1_ref[...].astype(jnp.float32), 0.0)          # bias + ReLU in f32
    # fc2 on the MXU: (out_pad, hidden) @ (hidden, tb) -> (out_pad, tb).
    out = jnp.dot(w2_ref[...], h.astype(w2_ref.dtype),
                  preferred_element_type=jnp.float32)
    o_ref[...] = (out + b2_ref[...].astype(jnp.float32)).astype(o_ref.dtype)


def linear_qnet_forward(x, w1t, b1, w2t, b2, *, out_features, block_batch=8192):
    """Fused fc1 -> ReLU -> fc2 in a feature-major (transposed) layout.

    x:   (B, in_features)                       any float dtype; cast to the param dtype
    w1t: (hidden, k_pad)    b1: (hidden, 1)     k_pad   = round_up(in_features, 8)
    w2t: (out_pad, hidden)  b2: (out_pad, 1)    out_pad = round_up(out_features, 8)
    Returns (B, out_features) in the param dtype (bf16 by default).
    """
    B, K = x.shape
    hidden, k_pad = w1t.shape
    out_pad = w2t.shape[0]
    dtype = w1t.dtype
    assert K <= k_pad and out_features <= out_pad and w2t.shape[1] == hidden

    # Single fused wrapper-side layout pass: pad K, put the batch on the lane axis,
    # cast to the compute dtype (both matmul operands must be bf16 to hit the bf16 MXU path).
    x_t = jnp.pad(x, ((0, 0), (0, k_pad - K))).T.astype(dtype)          # (k_pad, B)

    # Batch tile: big enough to amortize the ~0.35 us per grid step, small enough that the
    # grid keeps >= 2 steps for large B (v7x dual-TC sharding of the "parallel" axis).
    if B <= _LANE:
        tb = B                                   # one block, equal to the full batch extent
    else:
        tb = min(block_batch,
                 _round_up(B, _LANE),
                 _round_up(pl.cdiv(B, 2), _LANE))
    grid = (pl.cdiv(B, tb),)                     # partial trailing block handled by Pallas

    itemsize = jnp.dtype(dtype).itemsize
    w_bytes = (k_pad * hidden + out_pad * hidden + hidden + out_pad) * itemsize
    flops = 2 * B * hidden * (k_pad + out_pad)
    bytes_accessed = (k_pad + out_pad) * B * itemsize + w_bytes

    # 2x-buffered x/out tiles + f32 hidden/output intermediates + resident weights.
    vmem_needed = (2 * tb * (k_pad + out_pad) * itemsize
                   + tb * (hidden + out_pad) * 4
                   + 2 * w_bytes)
    try:
        info = pltpu.get_tpu_info()
        phys_vmem = int(getattr(info, "vmem_capacity_bytes", 64 << 20))
    except Exception:
        phys_vmem = 64 << 20                     # conservative: v7x per-TC VMEM
    vmem_cap = min(phys_vmem * 5 // 8, 48 << 20)  # headroom for Mosaic internal scratch
    vmem_limit = int(min(max(2 * vmem_needed, 8 << 20), vmem_cap))

    out_t = pl.pallas_call(
        qnet_kernel,
        out_shape=jax.ShapeDtypeStruct((out_pad, B), dtype),
        grid=grid,
        in_specs=[
            pl.BlockSpec((k_pad, tb), lambda i: (0, i)),        # x_T batch tile (lanes = batch)
            pl.BlockSpec((hidden, k_pad), lambda i: (0, 0)),    # w1t, resident across the grid
            pl.BlockSpec((hidden, 1), lambda i: (0, 0)),        # b1
            pl.BlockSpec((out_pad, hidden), lambda i: (0, 0)),  # w2t, resident across the grid
            pl.BlockSpec((out_pad, 1), lambda i: (0, 0)),       # b2
        ],
        out_specs=pl.BlockSpec((out_pad, tb), lambda i: (0, i)),  # narrow, lane-dense output
        compiler_params=pltpu.CompilerParams(
            dimension_semantics=("parallel",),
            vmem_limit_bytes=vmem_limit),
        cost_estimate=pl.CostEstimate(flops=flops, transcendentals=0,
                                      bytes_accessed=bytes_accessed),
    )(x_t, w1t, b1, w2t, b2)

    # Tiny (out_features, B) -> (B, out_features) slice + transpose (3*B elements).
    return out_t[:out_features, :].T


def init_params(key, in_features=11, hidden_size=256, out_features=3,
                dtype=jnp.bfloat16):
    """PyTorch nn.Linear-style init (U[-1/sqrt(fan_in), +1/sqrt(fan_in)]) stored in the
    feature-major layout the kernel consumes:
      w1t: (hidden, round_up(in, 8))    b1: (hidden, 1)
      w2t: (round_up(out, 8), hidden)   b2: (round_up(out, 8), 1)
    Padded rows/cols are exactly zero so the math is unchanged. bf16 by default (the kernel
    keeps f32 accumulation and f32 bias/ReLU); pass dtype=jnp.float32 for exact f32."""
    k1, k2, k3, k4 = jax.random.split(key, 4)
    bound1 = 1.0 / float(in_features) ** 0.5
    bound2 = 1.0 / float(hidden_size) ** 0.5
    k_pad = _round_up(in_features, _SUBLANE)
    out_pad = _round_up(out_features, _SUBLANE)
    w1 = jax.random.uniform(k1, (hidden_size, in_features), jnp.float32,
                            minval=-bound1, maxval=bound1)
    b1 = jax.random.uniform(k2, (hidden_size, 1), jnp.float32,
                            minval=-bound1, maxval=bound1)
    w2 = jax.random.uniform(k3, (out_features, hidden_size), jnp.float32,
                            minval=-bound2, maxval=bound2)
    b2 = jax.random.uniform(k4, (out_features, 1), jnp.float32,
                            minval=-bound2, maxval=bound2)
    w1t = jnp.pad(w1, ((0, 0), (0, k_pad - in_features))).astype(dtype)
    w2t = jnp.pad(w2, ((0, out_pad - out_features), (0, 0))).astype(dtype)
    b2p = jnp.pad(b2, ((0, out_pad - out_features), (0, 0))).astype(dtype)
    return w1t, b1.astype(dtype), w2t, b2p


def reference_forward(x, w1t, b1, w2t, b2, in_features, out_features):
    """Pure-JAX reference following the same dtype path as the kernel
    (low-precision operands, f32 accumulation, f32 bias/ReLU, output in param dtype)."""
    dtype = w1t.dtype
    xc = x.astype(dtype)
    h = jnp.dot(xc, w1t[:, :in_features].T, preferred_element_type=jnp.float32)
    h = jnp.maximum(h + b1[:, 0].astype(jnp.float32), 0.0)
    o = jnp.dot(h.astype(dtype), w2t[:out_features].T,
                preferred_element_type=jnp.float32)
    return (o + b2[:out_features, 0].astype(jnp.float32)).astype(dtype)


if __name__ == "__main__":
    key = jax.random.PRNGKey(0)
    k_x, k_x2, k_p = jax.random.split(key, 3)

    in_features, hidden_size, out_features = 11, 256, 3
    params = init_params(k_p, in_features, hidden_size, out_features)

    fwd = jax.jit(linear_qnet_forward, static_argnames=("out_features", "block_batch"))

    # Tiny-batch case from the module spec (B=2). At this size the call is launch/DMA-latency
    # bound -- batch many evaluations per call in real use.
    x_small = jax.random.normal(k_x, (2, in_features), jnp.float32)
    out_small = jax.block_until_ready(fwd(x_small, *params, out_features=out_features))
    ref_small = reference_forward(x_small, *params, in_features, out_features)
    assert out_small.shape == (2, out_features)
    assert jnp.allclose(out_small.astype(jnp.float32), ref_small.astype(jnp.float32),
                        atol=2e-2, rtol=2e-2)

    # Larger batch: exercises the multi-step "parallel" grid and the partial trailing tile.
    x_big = jax.random.normal(k_x2, (200, in_features), jnp.float32)
    out_big = jax.block_until_ready(fwd(x_big, *params, out_features=out_features))
    ref_big = reference_forward(x_big, *params, in_features, out_features)
    assert out_big.shape == (200, out_features)
    assert jnp.allclose(out_big.astype(jnp.float32), ref_big.astype(jnp.float32),
                        atol=2e-2, rtol=2e-2)

    print("KERNEL_OK")
</pallas_src>

<mosaic_0001>
module attributes {stable_mosaic.version = 11 : i64} {
  func.func @qnet_kernel(%arg0: i32, %arg1: memref<16x2xbf16, #tpu.memory_space<vmem>>, %arg2: memref<256x16xbf16, #tpu.memory_space<vmem>>, %arg3: memref<256x1xbf16, #tpu.memory_space<vmem>>, %arg4: memref<8x256xbf16, #tpu.memory_space<vmem>>, %arg5: memref<8x1xbf16, #tpu.memory_space<vmem>>, %arg6: memref<8x2xbf16, #tpu.memory_space<vmem>>) attributes {dimension_semantics = [#tpu.dimension_semantics<parallel>], iteration_bounds = array<i64: 1>, scalar_prefetch = 0 : i64, scratch_operands = 0 : i64, tpu.core_type = #tpu.core_type<tc>, window_params = [{transform_indices = @transform_0, window_bounds = array<i64: 16, 2>}, {pipeline_mode = #tpu.pipeline_mode<synchronous>, transform_indices = @transform_1, window_bounds = array<i64: 256, 16>}, {pipeline_mode = #tpu.pipeline_mode<synchronous>, transform_indices = @transform_2, window_bounds = array<i64: 256, 1>}, {pipeline_mode = #tpu.pipeline_mode<synchronous>, transform_indices = @transform_3, window_bounds = array<i64: 8, 256>}, {pipeline_mode = #tpu.pipeline_mode<synchronous>, transform_indices = @transform_4, window_bounds = array<i64: 8, 1>}, {transform_indices = @transform_5, window_bounds = array<i64: 8, 2>}]} {
    %c0 = arith.constant 0 : index
    %c0_0 = arith.constant 0 : index
    %0 = vector.load %arg2[%c0, %c0_0] : memref<256x16xbf16, #tpu.memory_space<vmem>>, vector<256x16xbf16>
    %c0_1 = arith.constant 0 : index
    %c0_2 = arith.constant 0 : index
    %1 = vector.load %arg1[%c0_1, %c0_2] : memref<16x2xbf16, #tpu.memory_space<vmem>>, vector<16x2xbf16>
    %cst = arith.constant dense<0.000000e+00> : vector<256x2xf32>
    %2 = tpu.matmul %0, %1, %cst {dimension_numbers = #tpu.dot_dimension_numbers<[1], [0], [0], [1], [0, 0, 1, 1], [], []>} : vector<256x16xbf16>, vector<16x2xbf16>, vector<256x2xf32> -> vector<256x2xf32>
    %c0_3 = arith.constant 0 : index
    %c0_4 = arith.constant 0 : index
    %3 = vector.load %arg3[%c0_3, %c0_4] : memref<256x1xbf16, #tpu.memory_space<vmem>>, vector<256x1xbf16>
    %4 = arith.extf %3 : vector<256x1xbf16> to vector<256x1xf32>
    %5 = vector.broadcast %4 : vector<256x1xf32> to vector<256x2xf32>
    %6 = arith.addf %2, %5 : vector<256x2xf32>
    %cst_5 = arith.constant 0.000000e+00 : f32
    %7 = vector.broadcast %cst_5 : f32 to vector<256x2xf32>
    %8 = arith.maximumf %6, %7 : vector<256x2xf32>
    %c0_6 = arith.constant 0 : index
    %c0_7 = arith.constant 0 : index
    %9 = vector.load %arg4[%c0_6, %c0_7] : memref<8x256xbf16, #tpu.memory_space<vmem>>, vector<8x256xbf16>
    %10 = arith.truncf %8 : vector<256x2xf32> to vector<256x2xbf16>
    %cst_8 = arith.constant dense<0.000000e+00> : vector<8x2xf32>
    %11 = tpu.matmul %9, %10, %cst_8 {dimension_numbers = #tpu.dot_dimension_numbers<[1], [0], [0], [1], [0, 0, 1, 1], [], []>} : vector<8x256xbf16>, vector<256x2xbf16>, vector<8x2xf32> -> vector<8x2xf32>
    %c0_9 = arith.constant 0 : index
    %c0_10 = arith.constant 0 : index
    %12 = vector.load %arg5[%c0_9, %c0_10] : memref<8x1xbf16, #tpu.memory_space<vmem>>, vector<8x1xbf16>
    %13 = arith.extf %12 : vector<8x1xbf16> to vector<8x1xf32>
    %14 = vector.broadcast %13 : vector<8x1xf32> to vector<8x2xf32>
    %15 = arith.addf %11, %14 : vector<8x2xf32>
    %16 = arith.truncf %15 : vector<8x2xf32> to vector<8x2xbf16>
    %c0_11 = arith.constant 0 : index
    %c0_12 = arith.constant 0 : index
    %17 = vector.load %arg6[%c0_11, %c0_12] : memref<8x2xbf16, #tpu.memory_space<vmem>>, vector<8x2xbf16>
    tpu.vector_store %arg6[%c0_11, %c0_12], %16 {strides = array<i32>} : memref<8x2xbf16, #tpu.memory_space<vmem>>, vector<8x2xbf16>,
    return
  }
  func.func @transform_0(%arg0: i32) -> (i32, i32) {
    %c0_i32 = arith.constant 0 : i32
    %c0_i32_0 = arith.constant 0 : i32
    return %c0_i32, %arg0 : i32, i32
  }
  func.func @transform_1(%arg0: i32) -> (i32, i32) {
    %c0_i32 = arith.constant 0 : i32
    %c0_i32_0 = arith.constant 0 : i32
    %c0_i32_1 = arith.constant 0 : i32
    return %c0_i32, %c0_i32_0 : i32, i32
  }
  func.func @transform_2(%arg0: i32) -> (i32, i32) {
    %c0_i32 = arith.constant 0 : i32
    %c0_i32_0 = arith.constant 0 : i32
    %c0_i32_1 = arith.constant 0 : i32
    return %c0_i32, %c0_i32_0 : i32, i32
  }
  func.func @transform_3(%arg0: i32) -> (i32, i32) {
    %c0_i32 = arith.constant 0 : i32
    %c0_i32_0 = arith.constant 0 : i32
    %c0_i32_1 = arith.constant 0 : i32
    return %c0_i32, %c0_i32_0 : i32, i32
  }
  func.func @transform_4(%arg0: i32) -> (i32, i32) {
    %c0_i32 = arith.constant 0 : i32
    %c0_i32_0 = arith.constant 0 : i32
    %c0_i32_1 = arith.constant 0 : i32
    return %c0_i32, %c0_i32_0 : i32, i32
  }
  func.func @transform_5(%arg0: i32) -> (i32, i32) {
    %c0_i32 = arith.constant 0 : i32
    %c0_i32_0 = arith.constant 0 : i32
    return %c0_i32, %arg0 : i32, i32
  }
}

</mosaic_0001>

<llo_original>
// kernel: linear_qnet_forward.1
$region0: #{linear_qnet_forward.1}
  #allocation0 [shape = 'u32[]', space=smem, size = 0x4, offset = 0x4, fixed_abs, tag = 'smem constant byte address 0x4 - core index']
  #allocation1 [shape = 'u32[72,128]{1,0:T(1,128)}', space=vmem, size = 0x9000, scoped, tag = 'internal scratch']
  %s0 = inlined_call_operand.vmem [shape: bf16[16,2], index: 0, kind: input, shape index: {}]
  %s1 = inlined_call_operand.vmem [shape: bf16[256,16], index: 1, kind: input, shape index: {}]
  %s2 = inlined_call_operand.vmem [shape: bf16[256,1], index: 2, kind: input, shape index: {}]
  %s3 = inlined_call_operand.vmem [shape: bf16[8,256], index: 3, kind: input, shape index: {}]
  %s4 = inlined_call_operand.vmem [shape: bf16[8,1], index: 4, kind: input, shape index: {}]
  %s5 = inlined_call_operand.vmem [shape: bf16[8,2], index: 5, kind: output, shape index: {}]
  %s6 = sld [smem:[#allocation0]]
  $region30: #{linear_qnet_forward.1} parent=0
    _
  %s8 = ssub.s32 1, %s6
  %s9 = scalar_select 0, %s8, %s6
  // Predicated region
  $region2: #{linear_qnet_forward.1} parent=0 // pred_check
    _
  $region3: #{linear_qnet_forward.1} parent=0 // pred_check_branch
    %11 = sbr.rel (0) target = $region5
  $region4: #{linear_qnet_forward.1} parent=0 // pred_region
    _
  $region5: #{linear_qnet_forward.1} parent=0 // pred_fallthru
    _
  // Predicated region
  $region6: #{linear_qnet_forward.1} parent=0 // pred_check
    _
  $region7: #{linear_qnet_forward.1} parent=0 // pred_check_branch
    %13 = sbr.rel (0) target = $region9
  $region8: #{linear_qnet_forward.1} parent=0 // pred_region
    _
  $region9: #{linear_qnet_forward.1} parent=0 // pred_fallthru
    _
  // Predicated region
  $region10: #{linear_qnet_forward.1} parent=0 // pred_check
    _
  $region11: #{linear_qnet_forward.1} parent=0 // pred_check_branch
    %15 = sbr.rel (0) target = $region13
  $region12: #{linear_qnet_forward.1} parent=0 // pred_region
    _
  $region13: #{linear_qnet_forward.1} parent=0 // pred_fallthru
    _
  // Predicated region
  $region14: #{linear_qnet_forward.1} parent=0 // pred_check
    _
  $region15: #{linear_qnet_forward.1} parent=0 // pred_check_branch
    %17 = sbr.rel (0) target = $region17
  $region16: #{linear_qnet_forward.1} parent=0 // pred_region
    _
  $region17: #{linear_qnet_forward.1} parent=0 // pred_fallthru
    _
  // Predicated region
  $region18: #{linear_qnet_forward.1} parent=0 // pred_check
    _
  $region19: #{linear_qnet_forward.1} parent=0 // pred_check_branch
    %19 = sbr.rel (0) target = $region21
  $region20: #{linear_qnet_forward.1} parent=0 // pred_region
    _
  $region21: #{linear_qnet_forward.1} parent=0 // pred_fallthru
    _
  %v21 = vld [vmem:[%s1] sm:$0xf]
  %v22 = vld [vmem:[%s1 + $0x4] sm:$0xf]
  %v23 = vld [vmem:[%s1 + $0x8] sm:$0xf]
  %v24 = vld [vmem:[%s1 + $0xc] sm:$0xf]
  %v25 = vld [vmem:[%s1 + $0x10] sm:$0xf]
  %v26 = vld [vmem:[%s1 + $0x14] sm:$0xf]
  %v27 = vld [vmem:[%s1 + $0x18] sm:$0xf]
  %v28 = vld [vmem:[%s1 + $0x1c] sm:$0xf]
  %v29 = vld [vmem:[%s1 + $0x20] sm:$0xf]
  %v30 = vld [vmem:[%s1 + $0x24] sm:$0xf]
  %v31 = vld [vmem:[%s1 + $0x28] sm:$0xf]
  %v32 = vld [vmem:[%s1 + $0x2c] sm:$0xf]
  %v33 = vld [vmem:[%s1 + $0x30] sm:$0xf]
  %v34 = vld [vmem:[%s1 + $0x34] sm:$0xf]
  %v35 = vld [vmem:[%s1 + $0x38] sm:$0xf]
  %v36 = vld [vmem:[%s1 + $0x3c] sm:$0xf]
  %v37 = vld [vmem:[%s1 + $0x40] sm:$0xf]
  %v38 = vld [vmem:[%s1 + $0x44] sm:$0xf]
  %v39 = vld [vmem:[%s1 + $0x48] sm:$0xf]
  %v40 = vld [vmem:[%s1 + $0x4c] sm:$0xf]
  %v41 = vld [vmem:[%s1 + $0x50] sm:$0xf]
  %v42 = vld [vmem:[%s1 + $0x54] sm:$0xf]
  %v43 = vld [vmem:[%s1 + $0x58] sm:$0xf]
  %v44 = vld [vmem:[%s1 + $0x5c] sm:$0xf]
  %v45 = vld [vmem:[%s1 + $0x60] sm:$0xf]
  %v46 = vld [vmem:[%s1 + $0x64] sm:$0xf]
  %v47 = vld [vmem:[%s1 + $0x68] sm:$0xf]
  %v48 = vld [vmem:[%s1 + $0x6c] sm:$0xf]
  %v49 = vld [vmem:[%s1 + $0x70] sm:$0xf]
  %v50 = vld [vmem:[%s1 + $0x74] sm:$0xf]
  %v51 = vld [vmem:[%s1 + $0x78] sm:$0xf]
  %v52 = vld [vmem:[%s1 + $0x7c] sm:$0xf]
  %v53 = vld [vmem:[%s0] sm:$0xf]
  %v54 = vld [vmem:[%s0 + $0x4] sm:$0xf]
  %v55 = vld [vmem:[%s2] sm:$0xf]
  %v56 = vld [vmem:[%s2 + $0x4] sm:$0xf]
  %v57 = vld [vmem:[%s2 + $0x8] sm:$0xf]
  %v58 = vld [vmem:[%s2 + $0xc] sm:$0xf]
  %v59 = vld [vmem:[%s2 + $0x10] sm:$0xf]
  %v60 = vld [vmem:[%s2 + $0x14] sm:$0xf]
  %v61 = vld [vmem:[%s2 + $0x18] sm:$0xf]
  %v62 = vld [vmem:[%s2 + $0x1c] sm:$0xf]
  %v63 = vld [vmem:[%s2 + $0x20] sm:$0xf]
  %v64 = vld [vmem:[%s2 + $0x24] sm:$0xf]
  %v65 = vld [vmem:[%s2 + $0x28] sm:$0xf]
  %v66 = vld [vmem:[%s2 + $0x2c] sm:$0xf]
  %v67 = vld [vmem:[%s2 + $0x30] sm:$0xf]
  %v68 = vld [vmem:[%s2 + $0x34] sm:$0xf]
  %v69 = vld [vmem:[%s2 + $0x38] sm:$0xf]
  %v70 = vld [vmem:[%s2 + $0x3c] sm:$0xf]
  %v71 = vld [vmem:[%s2 + $0x40] sm:$0xf]
  %v72 = vld [vmem:[%s2 + $0x44] sm:$0xf]
  %v73 = vld [vmem:[%s2 + $0x48] sm:$0xf]
  %v74 = vld [vmem:[%s2 + $0x4c] sm:$0xf]
  %v75 = vld [vmem:[%s2 + $0x50] sm:$0xf]
  %v76 = vld [vmem:[%s2 + $0x54] sm:$0xf]
  %v77 = vld [vmem:[%s2 + $0x58] sm:$0xf]
  %v78 = vld [vmem:[%s2 + $0x5c] sm:$0xf]
  %v79 = vld [vmem:[%s2 + $0x60] sm:$0xf]
  %v80 = vld [vmem:[%s2 + $0x64] sm:$0xf]
  %v81 = vld [vmem:[%s2 + $0x68] sm:$0xf]
  %v82 = vld [vmem:[%s2 + $0x6c] sm:$0xf]
  %v83 = vld [vmem:[%s2 + $0x70] sm:$0xf]
  %v84 = vld [vmem:[%s2 + $0x74] sm:$0xf]
  %v85 = vld [vmem:[%s2 + $0x78] sm:$0xf]
  %v86 = vld [vmem:[%s2 + $0x7c] sm:$0xf]
  %v87 = vunpack.c.l.bf16 %v55
  %v88 = vunpack.c.l.bf16 %v56
  %v89 = vunpack.c.l.bf16 %v57
  %v90 = vunpack.c.l.bf16 %v58
  %v91 = vunpack.c.l.bf16 %v59
  %v92 = vunpack.c.l.bf16 %v60
  %v93 = vunpack.c.l.bf16 %v61
  %v94 = vunpack.c.l.bf16 %v62
  %v95 = vunpack.c.l.bf16 %v63
  %v96 = vunpack.c.l.bf16 %v64
  %v97 = vunpack.c.l.bf16 %v65
  %v98 = vunpack.c.l.bf16 %v66
  %v99 = vunpack.c.l.bf16 %v67
  %v100 = vunpack.c.l.bf16 %v68
  %v101 = vunpack.c.l.bf16 %v69
  %v102 = vunpack.c.l.bf16 %v70
  %v103 = vunpack.c.l.bf16 %v71
  %v104 = vunpack.c.l.bf16 %v72
  %v105 = vunpack.c.l.bf16 %v73
  %v106 = vunpack.c.l.bf16 %v74
  %v107 = vunpack.c.l.bf16 %v75
  %v108 = vunpack.c.l.bf16 %v76
  %v109 = vunpack.c.l.bf16 %v77
  %v110 = vunpack.c.l.bf16 %v78
  %v111 = vunpack.c.l.bf16 %v79
  %v112 = vunpack.c.l.bf16 %v80
  %v113 = vunpack.c.l.bf16 %v81
  %v114 = vunpack.c.l.bf16 %v82
  %v115 = vunpack.c.l.bf16 %v83
  %v116 = vunpack.c.l.bf16 %v84
  %v117 = vunpack.c.l.bf16 %v85
  %v118 = vunpack.c.l.bf16 %v86
  %120 = vset.pattern.permute.xlu0 0
  %121 = vperm.xlu0 %120, %v87
  %v122 = vpop.permute.xlu0 %121
  %125 = vset.pattern.permute.xlu0 0
  %126 = vperm.xlu0 %125, %v88
  %v127 = vpop.permute.xlu0 %126
  %130 = vset.pattern.permute.xlu0 0
  %131 = vperm.xlu0 %130, %v89
  %v132 = vpop.permute.xlu0 %131
  %135 = vset.pattern.permute.xlu0 0
  %136 = vperm.xlu0 %135, %v90
  %v137 = vpop.permute.xlu0 %136
  %140 = vset.pattern.permute.xlu0 0
  %141 = vperm.xlu0 %140, %v91
  %v142 = vpop.permute.xlu0 %141
  %145 = vset.pattern.permute.xlu0 0
  %146 = vperm.xlu0 %145, %v92
  %v147 = vpop.permute.xlu0 %146
  %150 = vset.pattern.permute.xlu0 0
  %151 = vperm.xlu0 %150, %v93
  %v152 = vpop.permute.xlu0 %151
  %155 = vset.pattern.permute.xlu0 0
  %156 = vperm.xlu0 %155, %v94
  %v157 = vpop.permute.xlu0 %156
  %160 = vset.pattern.permute.xlu0 0
  %161 = vperm.xlu0 %160, %v95
  %v162 = vpop.permute.xlu0 %161
  %165 = vset.pattern.permute.xlu0 0
  %166 = vperm.xlu0 %165, %v96
  %v167 = vpop.permute.xlu0 %166
  %170 = vset.pattern.permute.xlu0 0
  %171 = vperm.xlu0 %170, %v97
  %v172 = vpop.permute.xlu0 %171
  %175 = vset.pattern.permute.xlu0 0
  %176 = vperm.xlu0 %175, %v98
  %v177 = vpop.permute.xlu0 %176
  %180 = vset.pattern.permute.xlu0 0
  %181 = vperm.xlu0 %180, %v99
  %v182 = vpop.permute.xlu0 %181
  %185 = vset.pattern.permute.xlu0 0
  %186 = vperm.xlu0 %185, %v100
  %v187 = vpop.permute.xlu0 %186
  %190 = vset.pattern.permute.xlu0 0
  %191 = vperm.xlu0 %190, %v101
  %v192 = vpop.permute.xlu0 %191
  %195 = vset.pattern.permute.xlu0 0
  %196 = vperm.xlu0 %195, %v102
  %v197 = vpop.permute.xlu0 %196
  %200 = vset.pattern.permute.xlu0 0
  %201 = vperm.xlu0 %200, %v103
  %v202 = vpop.permute.xlu0 %201
  %205 = vset.pattern.permute.xlu0 0
  %206 = vperm.xlu0 %205, %v104
  %v207 = vpop.permute.xlu0 %206
  %210 = vset.pattern.permute.xlu0 0
  %211 = vperm.xlu0 %210, %v105
  %v212 = vpop.permute.xlu0 %211
  %215 = vset.pattern.permute.xlu0 0
  %216 = vperm.xlu0 %215, %v106
  %v217 = vpop.permute.xlu0 %216
  %220 = vset.pattern.permute.xlu0 0
  %221 = vperm.xlu0 %220, %v107
  %v222 = vpop.permute.xlu0 %221
  %225 = vset.pattern.permute.xlu0 0
  %226 = vperm.xlu0 %225, %v108
  %v227 = vpop.permute.xlu0 %226
  %230 = vset.pattern.permute.xlu0 0
  %231 = vperm.xlu0 %230, %v109
  %v232 = vpop.permute.xlu0 %231
  %235 = vset.pattern.permute.xlu0 0
  %236 = vperm.xlu0 %235, %v110
  %v237 = vpop.permute.xlu0 %236
  %240 = vset.pattern.permute.xlu0 0
  %241 = vperm.xlu0 %240, %v111
  %v242 = vpop.permute.xlu0 %241
  %245 = vset.pattern.permute.xlu0 0
  %246 = vperm.xlu0 %245, %v112
  %v247 = vpop.permute.xlu0 %246
  %250 = vset.pattern.permute.xlu0 0
  %251 = vperm.xlu0 %250, %v113
  %v252 = vpop.permute.xlu0 %251
  %255 = vset.pattern.permute.xlu0 0
  %256 = vperm.xlu0 %255, %v114
  %v257 = vpop.permute.xlu0 %256
  %260 = vset.pattern.permute.xlu0 0
  %261 = vperm.xlu0 %260, %v115
  %v262 = vpop.permute.xlu0 %261
  %265 = vset.pattern.permute.xlu0 0
  %266 = vperm.xlu0 %265, %v116
  %v267 = vpop.permute.xlu0 %266
  %270 = vset.pattern.permute.xlu0 0
  %271 = vperm.xlu0 %270, %v117
  %v272 = vpop.permute.xlu0 %271
  %275 = vset.pattern.permute.xlu0 0
  %276 = vperm.xlu0 %275, %v118
  %v277 = vpop.permute.xlu0 %276
  %v311 = vunpack.c.l.b16 %v21
  %v312 = vunpack.c.l.b16 %v22
  %v313 = vunpack.c.l.b16 %v23
  %v314 = vunpack.c.l.b16 %v24
  %v315 = vunpack.c.l.b16 %v25
  %v316 = vunpack.c.l.b16 %v26
  %v317 = vunpack.c.l.b16 %v27
  %v318 = vunpack.c.l.b16 %v28
  %v319 = vunpack.c.l.b16 %v29
  %v320 = vunpack.c.l.b16 %v30
  %v321 = vunpack.c.l.b16 %v31
  %v322 = vunpack.c.l.b16 %v32
  %v323 = vunpack.c.l.b16 %v33
  %v324 = vunpack.c.l.b16 %v34
  %v325 = vunpack.c.l.b16 %v35
  %v326 = vunpack.c.l.b16 %v36
  %v327 = vunpack.c.l.b16 %v37
  %v328 = vunpack.c.l.b16 %v38
  %v329 = vunpack.c.l.b16 %v39
  %v330 = vunpack.c.l.b16 %v40
  %v331 = vunpack.c.l.b16 %v41
  %v332 = vunpack.c.l.b16 %v42
  %v333 = vunpack.c.l.b16 %v43
  %v334 = vunpack.c.l.b16 %v44
  %v335 = vunpack.c.l.b16 %v45
  %v336 = vunpack.c.l.b16 %v46
  %v337 = vunpack.c.l.b16 %v47
  %v338 = vunpack.c.l.b16 %v48
  %v339 = vunpack.c.l.b16 %v49
  %v340 = vunpack.c.l.b16 %v50
  %v341 = vunpack.c.l.b16 %v51
  %v342 = vunpack.c.l.b16 %v52
  %v343 = vpack.c.b16 %v312, %v311
  %v344 = vpack.c.b16 %v314, %v313
  %v345 = vpack.c.b16 %v316, %v315
  %v346 = vpack.c.b16 %v318, %v317
  %v347 = vpack.c.b16 %v320, %v319
  %v348 = vpack.c.b16 %v322, %v321
  %v349 = vpack.c.b16 %v324, %v323
  %v350 = vpack.c.b16 %v326, %v325
  %v351 = vpack.c.b16 %v328, %v327
  %v352 = vpack.c.b16 %v330, %v329
  %v353 = vpack.c.b16 %v332, %v331
  %v354 = vpack.c.b16 %v334, %v333
  %v355 = vpack.c.b16 %v336, %v335
  %v356 = vpack.c.b16 %v338, %v337
  %v357 = vpack.c.b16 %v340, %v339
  %v358 = vpack.c.b16 %v342, %v341
  %v361 = vunpack.c.l.b16 %v53
  %v362 = vunpack.c.l.b16 %v54
  %v363 = vpack.c.b16 %v362, %v361
  %vm365 = vcmask 130048
  %v367 = vsel %vm365, %v343, 0
  %v370 = vsel %vm365, %v344, 0
  %v373 = vsel %vm365, %v345, 0
  %v376 = vsel %vm365, %v346, 0
  %v379 = vsel %vm365, %v347, 0
  %v382 = vsel %vm365, %v348, 0
  %v385 = vsel %vm365, %v349, 0
  %v388 = vsel %vm365, %v350, 0
  %v391 = vsel %vm365, %v351, 0
  %v394 = vsel %vm365, %v352, 0
  %v397 = vsel %vm365, %v353, 0
  %v400 = vsel %vm365, %v354, 0
  %v403 = vsel %vm365, %v355, 0
  %v406 = vsel %vm365, %v356, 0
  %v409 = vsel %vm365, %v357, 0
  %v412 = vsel %vm365, %v358, 0
  %414 = vmatpush.bf16.msra.mxu0 0
  %415 = vmatpush.bf16.msra.mxu0 0
  %416 = vmatpush.bf16.msra.mxu0 0
  %417 = vmatpush.bf16.msra.mxu0 0
  %418 = vmatpush.bf16.msra.mxu0 0
  %419 = vmatpush.bf16.msra.mxu0 0
  %420 = vmatpush.bf16.msra.mxu0 0
  %421 = vmatpush.bf16.msra.mxu0 %v363
  %422 = vmatmul.bf16.gmra.mxu0 %v367
  %v423 = vpop.f32.mrf.mxu0
  %v424 = vadd.f32 %v122, %v423
  %v425 = vpop.f32.mrf.mxu0
  %v426 = vadd.f32 %v127, %v425
  %427 = vmatmul.bf16.gmra.mxu0 %v370
  %v428 = vpop.f32.mrf.mxu0
  %v429 = vadd.f32 %v132, %v428
  %v430 = vpop.f32.mrf.mxu0
  %v431 = vadd.f32 %v137, %v430
  %432 = vmatmul.bf16.gmra.mxu0 %v373
  %v433 = vpop.f32.mrf.mxu0
  %v434 = vadd.f32 %v142, %v433
  %v435 = vpop.f32.mrf.mxu0
  %v436 = vadd.f32 %v147, %v435
  %437 = vmatmul.bf16.gmra.mxu0 %v376
  %v438 = vpop.f32.mrf.mxu0
  %v439 = vadd.f32 %v152, %v438
  %v440 = vpop.f32.mrf.mxu0
  %v441 = vadd.f32 %v157, %v440
  %442 = vmatmul.bf16.gmra.mxu0 %v379
  %v443 = vpop.f32.mrf.mxu0
  %v444 = vadd.f32 %v162, %v443
  %v445 = vpop.f32.mrf.mxu0
  %v446 = vadd.f32 %v167, %v445
  %447 = vmatmul.bf16.gmra.mxu0 %v382
  %v448 = vpop.f32.mrf.mxu0
  %v449 = vadd.f32 %v172, %v448
  %v450 = vpop.f32.mrf.mxu0
  %v451 = vadd.f32 %v177, %v450
  %452 = vmatmul.bf16.gmra.mxu0 %v385
  %v453 = vpop.f32.mrf.mxu0
  %v454 = vadd.f32 %v182, %v453
  %v455 = vpop.f32.mrf.mxu0
  %v456 = vadd.f32 %v187, %v455
  %457 = vmatmul.bf16.gmra.mxu0 %v388
  %v458 = vpop.f32.mrf.mxu0
  %v459 = vadd.f32 %v192, %v458
  %v460 = vpop.f32.mrf.mxu0
  %v461 = vadd.f32 %v197, %v460
  %462 = vmatmul.bf16.gmra.mxu0 %v391
  %v463 = vpop.f32.mrf.mxu0
  %v464 = vadd.f32 %v202, %v463
  %v465 = vpop.f32.mrf.mxu0
  %v466 = vadd.f32 %v207, %v465
  %467 = vmatmul.bf16.gmra.mxu0 %v394
  %v468 = vpop.f32.mrf.mxu0
  %v469 = vadd.f32 %v212, %v468
  %v470 = vpop.f32.mrf.mxu0
  %v471 = vadd.f32 %v217, %v470
  %472 = vmatmul.bf16.gmra.mxu0 %v397
  %v473 = vpop.f32.mrf.mxu0
  %v474 = vadd.f32 %v222, %v473
  %v475 = vpop.f32.mrf.mxu0
  %v476 = vadd.f32 %v227, %v475
  %477 = vmatmul.bf16.gmra.mxu0 %v400
  %v478 = vpop.f32.mrf.mxu0
  %v479 = vadd.f32 %v232, %v478
  %v480 = vpop.f32.mrf.mxu0
  %v481 = vadd.f32 %v237, %v480
  %482 = vmatmul.bf16.gmra.mxu0 %v403
  %v483 = vpop.f32.mrf.mxu0
  %v484 = vadd.f32 %v242, %v483
  %v485 = vpop.f32.mrf.mxu0
  %v486 = vadd.f32 %v247, %v485
  %487 = vmatmul.bf16.gmra.mxu0 %v406
  %v488 = vpop.f32.mrf.mxu0
  %v489 = vadd.f32 %v252, %v488
  %v490 = vpop.f32.mrf.mxu0
  %v491 = vadd.f32 %v257, %v490
  %492 = vmatmul.bf16.gmra.mxu0 %v409
  %v493 = vpop.f32.mrf.mxu0
  %v494 = vadd.f32 %v262, %v493
  %v495 = vpop.f32.mrf.mxu0
  %v496 = vadd.f32 %v267, %v495
  %497 = vmatmul.bf16.gmra.mxu0 %v412
  %v498 = vpop.f32.mrf.mxu0
  %v499 = vadd.f32 %v272, %v498
  %v500 = vpop.f32.mrf.mxu0
  %v501 = vadd.f32 %v277, %v500
  %502 = vdwg.mxu0
  %v503 = vmax.f32 %v424, 0.0
  %v504 = vmax.f32 %v426, 0.0
  %v505 = vmax.f32 %v429, 0.0
  %v506 = vmax.f32 %v431, 0.0
  %v507 = vmax.f32 %v434, 0.0
  %v508 = vmax.f32 %v436, 0.0
  %v509 = vmax.f32 %v439, 0.0
  %v510 = vmax.f32 %v441, 0.0
  %v511 = vmax.f32 %v444, 0.0
  %v512 = vmax.f32 %v446, 0.0
  %v513 = vmax.f32 %v449, 0.0
  %v514 = vmax.f32 %v451, 0.0
  %v515 = vmax.f32 %v454, 0.0
  %v516 = vmax.f32 %v456, 0.0
  %v517 = vmax.f32 %v459, 0.0
  %v518 = vmax.f32 %v461, 0.0
  %v519 = vmax.f32 %v464, 0.0
  %v520 = vmax.f32 %v466, 0.0
  %v521 = vmax.f32 %v469, 0.0
  %v522 = vmax.f32 %v471, 0.0
  %v523 = vmax.f32 %v474, 0.0
  %v524 = vmax.f32 %v476, 0.0
  %v525 = vmax.f32 %v479, 0.0
  %v526 = vmax.f32 %v481, 0.0
  %v527 = vmax.f32 %v484, 0.0
  %v528 = vmax.f32 %v486, 0.0
  %v529 = vmax.f32 %v489, 0.0
  %v530 = vmax.f32 %v491, 0.0
  %v531 = vmax.f32 %v494, 0.0
  %v532 = vmax.f32 %v496, 0.0
  %v533 = vmax.f32 %v499, 0.0
  %v534 = vmax.f32 %v501, 0.0
  %v535 = vld [vmem:[%s3] sm:$0xff]
  %v536 = vpack.c.bf16 %v504, %v503
  %v537 = vpack.c.bf16 %v506, %v505
  %v538 = vpack.c.bf16 %v508, %v507
  %v539 = vpack.c.bf16 %v510, %v509
  %v540 = vpack.c.bf16 %v512, %v511
  %v541 = vpack.c.bf16 %v514, %v513
  %v542 = vpack.c.bf16 %v516, %v515
  %v543 = vpack.c.bf16 %v518, %v517
  %v544 = vpack.c.bf16 %v520, %v519
  %v545 = vpack.c.bf16 %v522, %v521
  %v546 = vpack.c.bf16 %v524, %v523
  %v547 = vpack.c.bf16 %v526, %v525
  %v548 = vpack.c.bf16 %v528, %v527
  %v549 = vpack.c.bf16 %v530, %v529
  %v550 = vpack.c.bf16 %v532, %v531
  %v551 = vpack.c.bf16 %v534, %v533
  %v552 = vld [vmem:[%s4] sm:$0xf]
  %v553 = vunpack.c.l.bf16 %v552
  %555 = vset.pattern.permute.xlu0 0
  %556 = vperm.xlu0 %555, %v553
  %v557 = vpop.permute.xlu0 %556
  %v560 = vunpack.c.l.b16 %v535
  %v561 = vunpack.c.h.b16 %v535
  %v562 = vpack.c.b16 %v560, %v560
  %v563 = vpack.c.b16 %v561, %v561
  %566 = vmatpush.bf16.msra.mxu0 %v543
  %567 = vmatpush.bf16.msra.mxu0 %v542
  %568 = vmatpush.bf16.msra.mxu0 %v541
  %569 = vmatpush.bf16.msra.mxu0 %v540
  %570 = vmatpush.bf16.msra.mxu0 %v539
  %571 = vmatpush.bf16.msra.mxu0 %v538
  %572 = vmatpush.bf16.msra.mxu0 %v537
  %573 = vmatpush.bf16.msra.mxu0 %v536
  %574 = vmatmul.bf16.gmra.mxu0 %v562
  %v575 = vpop.f32.mrf.mxu0
  %v576 = vadd.f32 %v557, %v575
  %v577 = vpop.f32.mrf.mxu0
  %578 = vdwg.mxu0
  %579 = vmatpush.bf16.msra.mxu0 %v551
  %580 = vmatpush.bf16.msra.mxu0 %v550
  %581 = vmatpush.bf16.msra.mxu0 %v549
  %582 = vmatpush.bf16.msra.mxu0 %v548
  %583 = vmatpush.bf16.msra.mxu0 %v547
  %584 = vmatpush.bf16.msra.mxu0 %v546
  %585 = vmatpush.bf16.msra.mxu0 %v545
  %586 = vmatpush.bf16.msra.mxu0 %v544
  %587 = vmatmul.bf16.gmra.mxu0 %v563
  %v588 = vpop.f32.mrf.mxu0
  %v589 = vadd.f32 %v576, %v588
  %v590 = vpop.f32.mrf.mxu0
  %591 = vdwg.mxu0
  %v592 = vpack.c.bf16 %v589, %v589
  %vm593 = vcmask 11264
  %594 = vst.msk [vmem:[%s5] sm:$0xf] %vm593, %v592
  // Predicated region
  $region22: #{linear_qnet_forward.1} parent=0 // pred_check
    _
  $region23: #{linear_qnet_forward.1} parent=0 // pred_check_branch
    %596 = sbr.rel (0) target = $region25
  $region24: #{linear_qnet_forward.1} parent=0 // pred_region
    _
  $region25: #{linear_qnet_forward.1} parent=0 // pred_fallthru
    _
  // Predicated region
  $region26: #{linear_qnet_forward.1} parent=0 // pred_check
    _
  $region27: #{linear_qnet_forward.1} parent=0 // pred_check_branch
    %598 = sbr.rel (0) target = $region29
  $region28: #{linear_qnet_forward.1} parent=0 // pred_region
    _
  $region29: #{linear_qnet_forward.1} parent=0 // pred_fallthru
    _

</llo_original>
